<compile_context>
chip_gen: v5e
topology: v5e:2x2
jax: 0.10.0
libtpu: 0.0.40
codegen_flags: <defaults>
</compile_context>

<pallas_src>
import functools
import math

import jax
import jax.numpy as jnp
from jax.experimental import pallas as pl
from jax.experimental.pallas import tpu as pltpu

LANE = 128
FUSE_MAX_N = 2048  # single fully-fused kernel below this node count


# ------------------------------ helpers -------------------------------------

def _round_up(v, m):
    return ((v + m - 1) // m) * m


def _lcm(a, b):
    return a * b // math.gcd(a, b)


def _pad_to(x, shape):
    pads = [(0, t - s) for s, t in zip(x.shape, shape)]
    return jnp.pad(x, pads)


def _vmem_limit_bytes():
    """Per-generation scoped-VMEM budget: ~3/4 of physical, capped at 96 MiB."""
    phys = None
    try:
        info = pltpu.get_tpu_info()
        phys = getattr(info, "vmem_capacity_bytes", None)
    except Exception:
        phys = None
    if not phys:
        phys = 64 * 1024 * 1024  # safe assumption (v7x-sized)
    return min(int(phys * 3 // 4), 96 * 1024 * 1024)


def _pick_tiles(n):
    """Default tiles for the tiled path (only used for large N)."""
    # tm: 256-aligned (full MXU pass on v6e/v7x); keep >=2 row tiles when
    # possible so v7x megacore can shard the "parallel" row axis.
    tm = 512
    while tm > 256 and _round_up(n, tm) // tm < 2:
        tm //= 2
    n_pad = _round_up(n, tm)
    # tk: largest power-of-two tile (<=2048) dividing the padded N.
    tk = tm
    for cand in (2048, 1024, 512, 256):
        if cand >= tm and n_pad % cand == 0:
            tk = cand
            break
    return tm, tk, n_pad


# --------------------------- fused small-graph kernel ------------------------

def _gcn_fused_kernel(a_ref, x_ref, w1_ref, b1_ref, w2_ref, b2_ref, o_ref):
    """Whole 2-layer GCN in VMEM: out = A @ relu((A@X)@W1 + b1) @ W2 + b2."""
    a = a_ref[...]
    ax = jnp.dot(a, x_ref[...], preferred_element_type=jnp.float32)
    h = jnp.dot(ax.astype(w1_ref.dtype), w1_ref[...],
                preferred_element_type=jnp.float32) + b1_ref[...]
    h = jnp.maximum(h, 0.0)
    hw2 = jnp.dot(h.astype(w2_ref.dtype), w2_ref[...],
                  preferred_element_type=jnp.float32)
    o_ref[...] = jnp.dot(a, hw2.astype(a.dtype),
                         preferred_element_type=jnp.float32) + b2_ref[...]


# --------------------------- tiled aggregation kernel ------------------------

def _agg_kernel(a_ref, z_ref, *rest, z_resident, layer1):
    """acc += A_tile @ Z; layer-specific epilogue at the last k step.

    layer1 epilogue:  O = (relu(acc @ W1 + b1)) @ W2    (H never leaves VMEM)
    layer2 epilogue:  O = acc + b2
    """
    if layer1:
        w1_ref, b1_ref, w2_ref, o_ref, acc_ref = rest
    else:
        b_ref, o_ref, acc_ref = rest

    k = pl.program_id(1)

    @pl.when(k == 0)
    def _():
        acc_ref[...] = jnp.zeros_like(acc_ref)

    tk = a_ref.shape[1]
    if z_resident:
        # Z is VMEM-resident (constant index_map, DMA'd once); slice rows here.
        start = pl.multiple_of(k * tk, tk)
        z = z_ref[pl.ds(start, tk), :]
    else:
        z = z_ref[...]
    acc_ref[...] += jnp.dot(a_ref[...], z, preferred_element_type=jnp.float32)

    @pl.when(k == pl.num_programs(1) - 1)
    def _():
        if layer1:
            h = jnp.dot(acc_ref[...].astype(w1_ref.dtype), w1_ref[...],
                        preferred_element_type=jnp.float32) + b1_ref[...]
            h = jnp.maximum(h, 0.0)
            y = jnp.dot(h.astype(w2_ref.dtype), w2_ref[...],
                        preferred_element_type=jnp.float32)
        else:
            y = acc_ref[...] + b_ref[...]
        o_ref[...] = y.astype(o_ref.dtype)


def _tiled_agg(a, z, extras, *, layer1, out_width, out_dtype,
               tm, tk, z_resident, vmem_limit):
    n_pad = a.shape[0]
    c_z = z.shape[1]
    grid = (n_pad // tm, n_pad // tk)  # reduction (k) axis last

    if z_resident:
        z_spec = pl.BlockSpec((n_pad, c_z), lambda i, k: (0, 0))   # resident
    else:
        z_spec = pl.BlockSpec((tk, c_z), lambda i, k: (k, 0))      # streamed

    in_specs = [pl.BlockSpec((tm, tk), lambda i, k: (i, k)), z_spec]
    for arr in extras:  # small weights / biases: resident full-array blocks
        in_specs.append(pl.BlockSpec(arr.shape, lambda i, k: (0, 0)))

    kernel = functools.partial(_agg_kernel, z_resident=z_resident, layer1=layer1)

    return pl.pallas_call(
        kernel,
        out_shape=jax.ShapeDtypeStruct((n_pad, out_width), out_dtype),
        grid_spec=pltpu.PrefetchScalarGridSpec(
            num_scalar_prefetch=0,
            grid=grid,
            in_specs=in_specs,
            out_specs=pl.BlockSpec((tm, out_width), lambda i, k: (i, 0)),
            scratch_shapes=[pltpu.VMEM((tm, c_z), jnp.float32)],
        ),
        compiler_params=pltpu.CompilerParams(
            dimension_semantics=("parallel", "arbitrary"),
            vmem_limit_bytes=vmem_limit,
        ),
    )(a, z, *extras)


# ------------------------------- forward ------------------------------------

def gcn_forward(a_norm, x, w1, b1, w2, b2, *, tm=None, tk=None, force_tiled=False):
    """GCN forward: out = A_norm @ relu(A_norm @ X @ W1 + b1) @ W2 + b2."""
    n = a_norm.shape[0]
    c_out = w2.shape[1]
    bf = jnp.bfloat16
    vmem_limit = _vmem_limit_bytes()

    cin_p = _round_up(x.shape[1], LANE)
    hid_p = _round_up(w1.shape[1], LANE)
    cout_p = _round_up(c_out, LANE)

    a_bf = a_norm if a_norm.dtype == bf else a_norm.astype(bf)
    w1_p = _pad_to(w1, (cin_p, hid_p)).astype(bf)
    b1_p = _pad_to(b1.reshape(1, -1), (1, hid_p)).astype(jnp.float32)
    w2_p = _pad_to(w2, (hid_p, cout_p)).astype(bf)
    b2_p = _pad_to(b2.reshape(1, -1), (1, cout_p)).astype(jnp.float32)

    # ---- small graphs: one fully-fused kernel, everything VMEM-resident ----
    if not force_tiled and n <= FUSE_MAX_N:
        n_pad = _round_up(n, 8)
        a_p = _pad_to(a_bf, (n_pad, n_pad))
        x_p = _pad_to(x, (n_pad, cin_p)).astype(bf)
        out = pl.pallas_call(
            _gcn_fused_kernel,
            out_shape=jax.ShapeDtypeStruct((n_pad, cout_p), jnp.float32),
            compiler_params=pltpu.CompilerParams(vmem_limit_bytes=vmem_limit),
        )(a_p, x_p, w1_p, b1_p, w2_p, b2_p)
        return out[:n, :c_out]

    # ---- large graphs: tiled aggregation, Z VMEM-resident ------------------
    if tm is None and tk is None:
        tm, tk, n_pad = _pick_tiles(n)
    else:
        tm = tm if tm is not None else 512
        tk = tk if tk is not None else max(tm, 512)
        n_pad = _round_up(n, _lcm(tm, tk))
    assert tm % 8 == 0 and tk % LANE == 0
    assert n_pad % tm == 0 and n_pad % tk == 0

    a_p = _pad_to(a_bf, (n_pad, n_pad))                     # zero-padded rows/cols
    x_p = _pad_to(x, (n_pad, cin_p)).astype(bf)

    # Resident Z is double-buffered by the pipeline; keep it resident only while
    # it leaves at least half the scoped-VMEM budget for A tiles/accumulator.
    c_z = max(cin_p, cout_p)
    z_resident = (2 * n_pad * c_z * 2) <= (vmem_limit // 2)

    # layer 1: (A @ X) accumulate, epilogue relu(.@W1 + b1) @ W2  (bf16 output)
    hw2 = _tiled_agg(a_p, x_p, [w1_p, b1_p, w2_p],
                     layer1=True, out_width=cout_p, out_dtype=bf,
                     tm=tm, tk=tk, z_resident=z_resident, vmem_limit=vmem_limit)
    # layer 2: (A @ HW2) accumulate, epilogue + b2  (f32 lane-dense output)
    out = _tiled_agg(a_p, hw2, [b2_p],
                     layer1=False, out_width=cout_p, out_dtype=jnp.float32,
                     tm=tm, tk=tk, z_resident=z_resident, vmem_limit=vmem_limit)
    return out[:n, :c_out]


# ------------------------------- JAX glue ------------------------------------

def build_norm_adj(edge_index, num_nodes, dtype=jnp.bfloat16):
    """Dense symmetric-normalized adjacency with self-loops (GCNConv gcn_norm)."""
    src, dst = edge_index[0], edge_index[1]
    a = jnp.zeros((num_nodes, num_nodes), jnp.float32)
    a = a.at[dst, src].set(1.0)                             # message src -> dst
    a = a + jnp.eye(num_nodes, dtype=jnp.float32)           # self-loops
    a = jnp.minimum(a, 1.0)                                 # dedup duplicate edges
    deg = a.sum(axis=1)
    dinv = jnp.where(deg > 0, 1.0 / jnp.sqrt(deg), 0.0)
    # final normalized matrix produced directly in the requested dtype
    return (dinv[:, None] * a * dinv[None, :]).astype(dtype)


def gcn_reference(a_norm, x, w1, b1, w2, b2):
    h = a_norm @ (x @ w1) + b1
    h = jnp.maximum(h, 0.0)
    return a_norm @ (h @ w2) + b2


# --------------------------------- main ---------------------------------------

if __name__ == "__main__":
    key = jax.random.PRNGKey(0)
    k_x, k_e, k_w1, k_w2 = jax.random.split(key, 4)

    num_nodes = 256
    in_channels = 16
    hidden = 64
    out_channels = 32
    num_edges = 1024

    # node features (graph_data.x analogue)
    x = jax.random.normal(k_x, (num_nodes, in_channels), dtype=jnp.float32)

    # random undirected edge list (edge_index analogue), made symmetric
    e = jax.random.randint(k_e, (2, num_edges), 0, num_nodes)
    edge_index = jnp.concatenate([e, e[::-1]], axis=1)       # (2, 2*num_edges)

    # glorot-like weights, zero bias (PyG GCNConv default)
    def glorot(k, shape):
        limit = jnp.sqrt(6.0 / (shape[0] + shape[1]))
        return jax.random.uniform(k, shape, jnp.float32, -limit, limit)

    w1 = glorot(k_w1, (in_channels, hidden))
    b1 = jnp.zeros((hidden,), jnp.float32)
    w2 = glorot(k_w2, (hidden, out_channels))
    b2 = jnp.zeros((out_channels,), jnp.float32)

    a_bf = build_norm_adj(edge_index, num_nodes, dtype=jnp.bfloat16)
    a_f32 = build_norm_adj(edge_index, num_nodes, dtype=jnp.float32)
    ref = gcn_reference(a_f32, x, w1, b1, w2, b2)

    # 1) fused single-kernel path (default for N <= 2048)
    out_fused = jax.block_until_ready(gcn_forward(a_bf, x, w1, b1, w2, b2))
    assert out_fused.shape == (num_nodes, out_channels)
    err_fused = float(jnp.max(jnp.abs(out_fused - ref)))
    assert err_fused < 5e-2, f"fused mismatch: max|err|={err_fused}"

    # 2) tiled multi-step path (what large graphs use); small test tiles here
    #    purely to exercise the (2,2) grid, resident-Z slicing and the
    #    pl.when init/accumulate/finalize paths — real defaults are tm=512, tk=2048.
    out_tiled = jax.block_until_ready(
        gcn_forward(a_bf, x, w1, b1, w2, b2, force_tiled=True, tm=128, tk=128))
    assert out_tiled.shape == (num_nodes, out_channels)
    err_tiled = float(jnp.max(jnp.abs(out_tiled - ref)))
    assert err_tiled < 5e-2, f"tiled mismatch: max|err|={err_tiled}"

    print("KERNEL_OK")
</pallas_src>

<mosaic_0001>
module attributes {stable_mosaic.version = 11 : i64} {
  func.func @_gcn_fused_kernel(%arg0: memref<256x256xbf16, #tpu.memory_space<vmem>>, %arg1: memref<256x128xbf16, #tpu.memory_space<vmem>>, %arg2: memref<128x128xbf16, #tpu.memory_space<vmem>>, %arg3: memref<1x128xf32, #tpu.memory_space<vmem>>, %arg4: memref<128x128xbf16, #tpu.memory_space<vmem>>, %arg5: memref<1x128xf32, #tpu.memory_space<vmem>>, %arg6: memref<256x128xf32, #tpu.memory_space<vmem>>) attributes {dimension_semantics = [], scalar_prefetch = 0 : i64, scratch_operands = 0 : i64, tpu.core_type = #tpu.core_type<tc>} {
    %c0 = arith.constant 0 : index
    %c0_0 = arith.constant 0 : index
    %0 = vector.load %arg0[%c0, %c0_0] : memref<256x256xbf16, #tpu.memory_space<vmem>>, vector<256x256xbf16>
    %c0_1 = arith.constant 0 : index
    %c0_2 = arith.constant 0 : index
    %1 = vector.load %arg1[%c0_1, %c0_2] : memref<256x128xbf16, #tpu.memory_space<vmem>>, vector<256x128xbf16>
    %cst = arith.constant dense<0.000000e+00> : vector<256x128xf32>
    %2 = tpu.matmul %0, %1, %cst {dimension_numbers = #tpu.dot_dimension_numbers<[1], [0], [0], [1], [0, 0, 1, 1], [], []>} : vector<256x256xbf16>, vector<256x128xbf16>, vector<256x128xf32> -> vector<256x128xf32>
    %3 = arith.truncf %2 : vector<256x128xf32> to vector<256x128xbf16>
    %c0_3 = arith.constant 0 : index
    %c0_4 = arith.constant 0 : index
    %4 = vector.load %arg2[%c0_3, %c0_4] : memref<128x128xbf16, #tpu.memory_space<vmem>>, vector<128x128xbf16>
    %cst_5 = arith.constant dense<0.000000e+00> : vector<256x128xf32>
    %5 = tpu.matmul %3, %4, %cst_5 {dimension_numbers = #tpu.dot_dimension_numbers<[1], [0], [0], [1], [0, 0, 1, 1], [], []>} : vector<256x128xbf16>, vector<128x128xbf16>, vector<256x128xf32> -> vector<256x128xf32>
    %c0_6 = arith.constant 0 : index
    %c0_7 = arith.constant 0 : index
    %6 = vector.load %arg3[%c0_6, %c0_7] : memref<1x128xf32, #tpu.memory_space<vmem>>, vector<1x128xf32>
    %7 = vector.broadcast %6 : vector<1x128xf32> to vector<256x128xf32>
    %8 = arith.addf %5, %7 : vector<256x128xf32>
    %cst_8 = arith.constant 0.000000e+00 : f32
    %9 = vector.broadcast %cst_8 : f32 to vector<256x128xf32>
    %10 = arith.maximumf %8, %9 : vector<256x128xf32>
    %11 = arith.truncf %10 : vector<256x128xf32> to vector<256x128xbf16>
    %c0_9 = arith.constant 0 : index
    %c0_10 = arith.constant 0 : index
    %12 = vector.load %arg4[%c0_9, %c0_10] : memref<128x128xbf16, #tpu.memory_space<vmem>>, vector<128x128xbf16>
    %cst_11 = arith.constant dense<0.000000e+00> : vector<256x128xf32>
    %13 = tpu.matmul %11, %12, %cst_11 {dimension_numbers = #tpu.dot_dimension_numbers<[1], [0], [0], [1], [0, 0, 1, 1], [], []>} : vector<256x128xbf16>, vector<128x128xbf16>, vector<256x128xf32> -> vector<256x128xf32>
    %14 = arith.truncf %13 : vector<256x128xf32> to vector<256x128xbf16>
    %cst_12 = arith.constant dense<0.000000e+00> : vector<256x128xf32>
    %15 = tpu.matmul %0, %14, %cst_12 {dimension_numbers = #tpu.dot_dimension_numbers<[1], [0], [0], [1], [0, 0, 1, 1], [], []>} : vector<256x256xbf16>, vector<256x128xbf16>, vector<256x128xf32> -> vector<256x128xf32>
    %c0_13 = arith.constant 0 : index
    %c0_14 = arith.constant 0 : index
    %16 = vector.load %arg5[%c0_13, %c0_14] : memref<1x128xf32, #tpu.memory_space<vmem>>, vector<1x128xf32>
    %17 = vector.broadcast %16 : vector<1x128xf32> to vector<256x128xf32>
    %18 = arith.addf %15, %17 : vector<256x128xf32>
    %c0_15 = arith.constant 0 : index
    %c0_16 = arith.constant 0 : index
    %19 = vector.load %arg6[%c0_15, %c0_16] : memref<256x128xf32, #tpu.memory_space<vmem>>, vector<256x128xf32>
    tpu.vector_store %arg6[%c0_15, %c0_16], %18 {strides = array<i32>} : memref<256x128xf32, #tpu.memory_space<vmem>>, vector<256x128xf32>,
    return
  }
}

</mosaic_0001>

<llo_original>
// kernel: tpu_custom_call.1
$region0: #{tpu_custom_call.1}
  #allocation0 [shape = 'u32[]', space=smem, size = 0x4, offset = 0x4, fixed_abs, tag = 'smem constant byte address 0x4 - core index']
  #allocation1 [shape = 'u32[72,128]{1,0:T(1,128)}', space=vmem, size = 0x9000, scoped, tag = 'internal scratch']
  %s0 = inlined_call_operand.hbm [shape: bf16[256,256], index: 0, kind: input, shape index: {}]
  %s1 = inlined_call_operand.hbm [shape: bf16[256,128], index: 1, kind: input, shape index: {}]
  %s2 = inlined_call_operand.hbm [shape: bf16[128,128], index: 2, kind: input, shape index: {}]
  %s3 = inlined_call_operand.vmem [shape: f32[1,128], index: 3, kind: input, shape index: {}]
  %s4 = inlined_call_operand.hbm [shape: bf16[128,128], index: 4, kind: input, shape index: {}]
  %s5 = inlined_call_operand.vmem [shape: f32[1,128], index: 5, kind: input, shape index: {}]
  %s6 = inlined_call_operand.hbm [shape: f32[256,128], index: 6, kind: output, shape index: {}]
  %s7 = sld [smem:[#allocation0]]
  $region50: #{tpu_custom_call.1} parent=0
    _
  %s9 = ssub.s32 1, %s7
  %s10 = scalar_select 0, %s9, %s7
  $region1: #{tpu_custom_call.1} parent=0
    #allocation2 [shape = 'u8[131072]{0}', space=vmem, size = 0x20000, scoped, tag = 'input window, operand 0, single buffered']
    #allocation3 [shape = 's32[1]{0}', space=sflag, size = 0x4, scoped, tag = 'scoped memory for tpu_custom_call.1']
    #allocation4 [shape = 's32[1]{0}', space=sflag, size = 0x4, scoped, tag = 'scoped memory for tpu_custom_call.1']
    #allocation5 [shape = 'u8[65536]{0}', space=vmem, size = 0x10000, scoped, tag = 'input window, operand 1, single buffered']
    #allocation6 [shape = 's32[1]{0}', space=sflag, size = 0x4, scoped, tag = 'scoped memory for tpu_custom_call.1']
    #allocation7 [shape = 'u8[32768]{0}', space=vmem, size = 0x8000, scoped, tag = 'input window, operand 2, single buffered']
    #allocation8 [shape = 'u8[32768]{0}', space=vmem, size = 0x8000, scoped, tag = 'input window, operand 4, single buffered']
    #allocation9 [shape = 's32[1]{0}', space=sflag, size = 0x4, scoped, tag = 'scoped memory for tpu_custom_call.1']
    #allocation10 [shape = 'u8[131072]{0}', space=vmem, size = 0x20000, scoped, tag = 'output window, operand 0, single buffered']
    %11 = vsyncpa [#allocation3], 0
    %12 = vsyncpa [#allocation6], 0
    %13 = vsyncpa [#allocation9], 0
    %14 = vsyncpa [#allocation4], 0
    // Predicated region
    $region2: #{tpu_custom_call.1} parent=1 // pred_check
      _
    $region3: #{tpu_custom_call.1} parent=1 // pred_check_branch
      %16 = sbr.rel (0) target = $region5
    $region4: #{tpu_custom_call.1} parent=1 // pred_region
      %18 = vsyncadd [#allocation3], 0
      %s19 = sshll.u32 %s0, 4
      %s20 = int_to_ptr.hbm [resolvable:$true] %s19
      %s21 = sshll.u32 [#allocation2], 4
      %s22 = int_to_ptr.vmem [resolvable:$true] %s21
      %27 = dma.hbm_to_vmem [thread:$0]  %s20, 4096, %s22, [#allocation3], 128, 128, 8
    $region5: #{tpu_custom_call.1} parent=1 // pred_fallthru
      _
    // Predicated region
    $region6: #{tpu_custom_call.1} parent=1 // pred_check
      _
    $region7: #{tpu_custom_call.1} parent=1 // pred_check_branch
      %29 = sbr.rel (0) target = $region9
    $region8: #{tpu_custom_call.1} parent=1 // pred_region
      %31 = vsyncadd [#allocation6], 0
      %s32 = sshll.u32 %s1, 4
      %s33 = int_to_ptr.hbm [resolvable:$true] %s32
      %s34 = sshll.u32 [#allocation5], 4
      %s35 = int_to_ptr.vmem [resolvable:$true] %s34
      %40 = dma.hbm_to_vmem [thread:$0]  %s33, 2048, %s35, [#allocation6], 64, 64, 4
    $region9: #{tpu_custom_call.1} parent=1 // pred_fallthru
      _
    // Predicated region
    $region10: #{tpu_custom_call.1} parent=1 // pred_check
      _
    $region11: #{tpu_custom_call.1} parent=1 // pred_check_branch
      %42 = sbr.rel (0) target = $region13
    $region12: #{tpu_custom_call.1} parent=1 // pred_region
      %44 = vsyncadd [#allocation6], 0
      %s45 = sshll.u32 %s2, 4
      %s46 = int_to_ptr.hbm [resolvable:$true] %s45
      %s47 = sshll.u32 [#allocation7], 4
      %s48 = int_to_ptr.vmem [resolvable:$true] %s47
      %53 = dma.hbm_to_vmem [thread:$0]  %s46, 1024, %s48, [#allocation6], 64, 64, 4
    $region13: #{tpu_custom_call.1} parent=1 // pred_fallthru
      _
    // Predicated region
    $region14: #{tpu_custom_call.1} parent=1 // pred_check
      _
    $region15: #{tpu_custom_call.1} parent=1 // pred_check_branch
      %55 = sbr.rel (0) target = $region17
    $region16: #{tpu_custom_call.1} parent=1 // pred_region
      _
    $region17: #{tpu_custom_call.1} parent=1 // pred_fallthru
      _
    // Predicated region
    $region18: #{tpu_custom_call.1} parent=1 // pred_check
      _
    $region19: #{tpu_custom_call.1} parent=1 // pred_check_branch
      %57 = sbr.rel (0) target = $region21
    $region20: #{tpu_custom_call.1} parent=1 // pred_region
      %59 = vsyncadd [#allocation9], 0
      %s60 = sshll.u32 %s4, 4
      %s61 = int_to_ptr.hbm [resolvable:$true] %s60
      %s62 = sshll.u32 [#allocation8], 4
      %s63 = int_to_ptr.vmem [resolvable:$true] %s62
      %68 = dma.hbm_to_vmem [thread:$0]  %s61, 1024, %s63, [#allocation9], 64, 64, 4
    $region21: #{tpu_custom_call.1} parent=1 // pred_fallthru
      _
    // Predicated region
    $region22: #{tpu_custom_call.1} parent=1 // pred_check
      _
    $region23: #{tpu_custom_call.1} parent=1 // pred_check_branch
      %70 = sbr.rel (0) target = $region25
    $region24: #{tpu_custom_call.1} parent=1 // pred_region
      _
    $region25: #{tpu_custom_call.1} parent=1 // pred_fallthru
      _
    // Predicated region
    $region26: #{tpu_custom_call.1} parent=1 // pred_check
      _
    $region27: #{tpu_custom_call.1} parent=1 // pred_check_branch
      %72 = sbr.rel (0) target = $region29
    $region28: #{tpu_custom_call.1} parent=1 // pred_region
      %74 = dma.done [#allocation3], 4096
    $region29: #{tpu_custom_call.1} parent=1 // pred_fallthru
      _
    // Predicated region
    $region30: #{tpu_custom_call.1} parent=1 // pred_check
      _
    $region31: #{tpu_custom_call.1} parent=1 // pred_check_branch
      %76 = sbr.rel (0) target = $region33
    $region32: #{tpu_custom_call.1} parent=1 // pred_region
      %78 = dma.done [#allocation6], 2048
    $region33: #{tpu_custom_call.1} parent=1 // pred_fallthru
      _
    // Predicated region
    $region34: #{tpu_custom_call.1} parent=1 // pred_check
      _
    $region35: #{tpu_custom_call.1} parent=1 // pred_check_branch
      %80 = sbr.rel (0) target = $region37
    $region36: #{tpu_custom_call.1} parent=1 // pred_region
      %82 = dma.done [#allocation6], 1024
    $region37: #{tpu_custom_call.1} parent=1 // pred_fallthru
      _
    // Predicated region
    $region38: #{tpu_custom_call.1} parent=1 // pred_check
      _
    $region39: #{tpu_custom_call.1} parent=1 // pred_check_branch
      %84 = sbr.rel (0) target = $region41
    $region40: #{tpu_custom_call.1} parent=1 // pred_region
      %86 = dma.done [#allocation9], 1024
    $region41: #{tpu_custom_call.1} parent=1 // pred_fallthru
      _
    %v87 = vld [vmem:[#allocation2] sm:$0xff]
    %v88 = vld [vmem:[#allocation2 + $0x8] sm:$0xff]
    %v89 = vld [vmem:[#allocation2 + $0x10] sm:$0xff]
    %v90 = vld [vmem:[#allocation2 + $0x18] sm:$0xff]
    %v91 = vld [vmem:[#allocation2 + $0x20] sm:$0xff]
    %v92 = vld [vmem:[#allocation2 + $0x28] sm:$0xff]
    %v93 = vld [vmem:[#allocation2 + $0x30] sm:$0xff]
    %v94 = vld [vmem:[#allocation2 + $0x38] sm:$0xff]
    %v95 = vld [vmem:[#allocation2 + $0x40] sm:$0xff]
    %v96 = vld [vmem:[#allocation2 + $0x48] sm:$0xff]
    %v97 = vld [vmem:[#allocation2 + $0x50] sm:$0xff]
    %v98 = vld [vmem:[#allocation2 + $0x58] sm:$0xff]
    %v99 = vld [vmem:[#allocation2 + $0x60] sm:$0xff]
    %v100 = vld [vmem:[#allocation2 + $0x68] sm:$0xff]
    %v101 = vld [vmem:[#allocation2 + $0x70] sm:$0xff]
    %v102 = vld [vmem:[#allocation2 + $0x78] sm:$0xff]
    %v103 = vld [vmem:[#allocation2 + $0x80] sm:$0xff]
    %v104 = vld [vmem:[#allocation2 + $0x88] sm:$0xff]
    %v105 = vld [vmem:[#allocation2 + $0x90] sm:$0xff]
    %v106 = vld [vmem:[#allocation2 + $0x98] sm:$0xff]
    %v107 = vld [vmem:[#allocation2 + $0xa0] sm:$0xff]
    %v108 = vld [vmem:[#allocation2 + $0xa8] sm:$0xff]
    %v109 = vld [vmem:[#allocation2 + $0xb0] sm:$0xff]
    %v110 = vld [vmem:[#allocation2 + $0xb8] sm:$0xff]
    %v111 = vld [vmem:[#allocation2 + $0xc0] sm:$0xff]
    %v112 = vld [vmem:[#allocation2 + $0xc8] sm:$0xff]
    %v113 = vld [vmem:[#allocation2 + $0xd0] sm:$0xff]
    %v114 = vld [vmem:[#allocation2 + $0xd8] sm:$0xff]
    %v115 = vld [vmem:[#allocation2 + $0xe0] sm:$0xff]
    %v116 = vld [vmem:[#allocation2 + $0xe8] sm:$0xff]
    %v117 = vld [vmem:[#allocation2 + $0xf0] sm:$0xff]
    %v118 = vld [vmem:[#allocation2 + $0xf8] sm:$0xff]
    %v119 = vld [vmem:[#allocation5] sm:$0xf]
    %v120 = vld [vmem:[#allocation5 + $0x4] sm:$0xf]
    %v121 = vld [vmem:[#allocation5 + $0x8] sm:$0xf]
    %v122 = vld [vmem:[#allocation5 + $0xc] sm:$0xf]
    %v123 = vld [vmem:[#allocation5 + $0x10] sm:$0xf]
    %v124 = vld [vmem:[#allocation5 + $0x14] sm:$0xf]
    %v125 = vld [vmem:[#allocation5 + $0x18] sm:$0xf]
    %v126 = vld [vmem:[#allocation5 + $0x1c] sm:$0xf]
    %v127 = vld [vmem:[#allocation5 + $0x20] sm:$0xf]
    %v128 = vld [vmem:[#allocation5 + $0x24] sm:$0xf]
    %v129 = vld [vmem:[#allocation5 + $0x28] sm:$0xf]
    %v130 = vld [vmem:[#allocation5 + $0x2c] sm:$0xf]
    %v131 = vld [vmem:[#allocation5 + $0x30] sm:$0xf]
    %v132 = vld [vmem:[#allocation5 + $0x34] sm:$0xf]
    %v133 = vld [vmem:[#allocation5 + $0x38] sm:$0xf]
    %v134 = vld [vmem:[#allocation5 + $0x3c] sm:$0xf]
    %v135 = vld [vmem:[#allocation5 + $0x40] sm:$0xf]
    %v136 = vld [vmem:[#allocation5 + $0x44] sm:$0xf]
    %v137 = vld [vmem:[#allocation5 + $0x48] sm:$0xf]
    %v138 = vld [vmem:[#allocation5 + $0x4c] sm:$0xf]
    %v139 = vld [vmem:[#allocation5 + $0x50] sm:$0xf]
    %v140 = vld [vmem:[#allocation5 + $0x54] sm:$0xf]
    %v141 = vld [vmem:[#allocation5 + $0x58] sm:$0xf]
    %v142 = vld [vmem:[#allocation5 + $0x5c] sm:$0xf]
    %v143 = vld [vmem:[#allocation5 + $0x60] sm:$0xf]
    %v144 = vld [vmem:[#allocation5 + $0x64] sm:$0xf]
    %v145 = vld [vmem:[#allocation5 + $0x68] sm:$0xf]
    %v146 = vld [vmem:[#allocation5 + $0x6c] sm:$0xf]
    %v147 = vld [vmem:[#allocation5 + $0x70] sm:$0xf]
    %v148 = vld [vmem:[#allocation5 + $0x74] sm:$0xf]
    %v149 = vld [vmem:[#allocation5 + $0x78] sm:$0xf]
    %v150 = vld [vmem:[#allocation5 + $0x7c] sm:$0xf]
    %v183 = vunpack.c.l.b16 %v87
    %v184 = vunpack.c.h.b16 %v87
    %v185 = vunpack.c.l.b16 %v88
    %v186 = vunpack.c.h.b16 %v88
    %v187 = vunpack.c.l.b16 %v89
    %v188 = vunpack.c.h.b16 %v89
    %v189 = vunpack.c.l.b16 %v90
    %v190 = vunpack.c.h.b16 %v90
    %v191 = vunpack.c.l.b16 %v91
    %v192 = vunpack.c.h.b16 %v91
    %v193 = vunpack.c.l.b16 %v92
    %v194 = vunpack.c.h.b16 %v92
    %v195 = vunpack.c.l.b16 %v93
    %v196 = vunpack.c.h.b16 %v93
    %v197 = vunpack.c.l.b16 %v94
    %v198 = vunpack.c.h.b16 %v94
    %v199 = vunpack.c.l.b16 %v95
    %v200 = vunpack.c.h.b16 %v95
    %v201 = vunpack.c.l.b16 %v96
    %v202 = vunpack.c.h.b16 %v96
    %v203 = vunpack.c.l.b16 %v97
    %v204 = vunpack.c.h.b16 %v97
    %v205 = vunpack.c.l.b16 %v98
    %v206 = vunpack.c.h.b16 %v98
    %v207 = vunpack.c.l.b16 %v99
    %v208 = vunpack.c.h.b16 %v99
    %v209 = vunpack.c.l.b16 %v100
    %v210 = vunpack.c.h.b16 %v100
    %v211 = vunpack.c.l.b16 %v101
    %v212 = vunpack.c.h.b16 %v101
    %v213 = vunpack.c.l.b16 %v102
    %v214 = vunpack.c.h.b16 %v102
    %v215 = vunpack.c.l.b16 %v103
    %v216 = vunpack.c.h.b16 %v103
    %v217 = vunpack.c.l.b16 %v104
    %v218 = vunpack.c.h.b16 %v104
    %v219 = vunpack.c.l.b16 %v105
    %v220 = vunpack.c.h.b16 %v105
    %v221 = vunpack.c.l.b16 %v106
    %v222 = vunpack.c.h.b16 %v106
    %v223 = vunpack.c.l.b16 %v107
    %v224 = vunpack.c.h.b16 %v107
    %v225 = vunpack.c.l.b16 %v108
    %v226 = vunpack.c.h.b16 %v108
    %v227 = vunpack.c.l.b16 %v109
    %v228 = vunpack.c.h.b16 %v109
    %v229 = vunpack.c.l.b16 %v110
    %v230 = vunpack.c.h.b16 %v110
    %v231 = vunpack.c.l.b16 %v111
    %v232 = vunpack.c.h.b16 %v111
    %v233 = vunpack.c.l.b16 %v112
    %v234 = vunpack.c.h.b16 %v112
    %v235 = vunpack.c.l.b16 %v113
    %v236 = vunpack.c.h.b16 %v113
    %v237 = vunpack.c.l.b16 %v114
    %v238 = vunpack.c.h.b16 %v114
    %v239 = vunpack.c.l.b16 %v115
    %v240 = vunpack.c.h.b16 %v115
    %v241 = vunpack.c.l.b16 %v116
    %v242 = vunpack.c.h.b16 %v116
    %v243 = vunpack.c.l.b16 %v117
    %v244 = vunpack.c.h.b16 %v117
    %v245 = vunpack.c.l.b16 %v118
    %v246 = vunpack.c.h.b16 %v118
    %v247 = vpack.c.b16 %v185, %v183
    %v248 = vpack.c.b16 %v186, %v184
    %v249 = vpack.c.b16 %v189, %v187
    %v250 = vpack.c.b16 %v190, %v188
    %v251 = vpack.c.b16 %v193, %v191
    %v252 = vpack.c.b16 %v194, %v192
    %v253 = vpack.c.b16 %v197, %v195
    %v254 = vpack.c.b16 %v198, %v196
    %v255 = vpack.c.b16 %v201, %v199
    %v256 = vpack.c.b16 %v202, %v200
    %v257 = vpack.c.b16 %v205, %v203
    %v258 = vpack.c.b16 %v206, %v204
    %v259 = vpack.c.b16 %v209, %v207
    %v260 = vpack.c.b16 %v210, %v208
    %v261 = vpack.c.b16 %v213, %v211
    %v262 = vpack.c.b16 %v214, %v212
    %v263 = vpack.c.b16 %v217, %v215
    %v264 = vpack.c.b16 %v218, %v216
    %v265 = vpack.c.b16 %v221, %v219
    %v266 = vpack.c.b16 %v222, %v220
    %v267 = vpack.c.b16 %v225, %v223
    %v268 = vpack.c.b16 %v226, %v224
    %v269 = vpack.c.b16 %v229, %v227
    %v270 = vpack.c.b16 %v230, %v228
    %v271 = vpack.c.b16 %v233, %v231
    %v272 = vpack.c.b16 %v234, %v232
    %v273 = vpack.c.b16 %v237, %v235
    %v274 = vpack.c.b16 %v238, %v236
    %v275 = vpack.c.b16 %v241, %v239
    %v276 = vpack.c.b16 %v242, %v240
    %v277 = vpack.c.b16 %v245, %v243
    %v278 = vpack.c.b16 %v246, %v244
    %v343 = vunpack.c.l.b16 %v119
    %v344 = vunpack.c.l.b16 %v120
    %v345 = vunpack.c.l.b16 %v121
    %v346 = vunpack.c.l.b16 %v122
    %v347 = vunpack.c.l.b16 %v123
    %v348 = vunpack.c.l.b16 %v124
    %v349 = vunpack.c.l.b16 %v125
    %v350 = vunpack.c.l.b16 %v126
    %v351 = vunpack.c.l.b16 %v127
    %v352 = vunpack.c.l.b16 %v128
    %v353 = vunpack.c.l.b16 %v129
    %v354 = vunpack.c.l.b16 %v130
    %v355 = vunpack.c.l.b16 %v131
    %v356 = vunpack.c.l.b16 %v132
    %v357 = vunpack.c.l.b16 %v133
    %v358 = vunpack.c.l.b16 %v134
    %v359 = vunpack.c.l.b16 %v135
    %v360 = vunpack.c.l.b16 %v136
    %v361 = vunpack.c.l.b16 %v137
    %v362 = vunpack.c.l.b16 %v138
    %v363 = vunpack.c.l.b16 %v139
    %v364 = vunpack.c.l.b16 %v140
    %v365 = vunpack.c.l.b16 %v141
    %v366 = vunpack.c.l.b16 %v142
    %v367 = vunpack.c.l.b16 %v143
    %v368 = vunpack.c.l.b16 %v144
    %v369 = vunpack.c.l.b16 %v145
    %v370 = vunpack.c.l.b16 %v146
    %v371 = vunpack.c.l.b16 %v147
    %v372 = vunpack.c.l.b16 %v148
    %v373 = vunpack.c.l.b16 %v149
    %v374 = vunpack.c.l.b16 %v150
    %v375 = vpack.c.b16 %v344, %v343
    %v376 = vpack.c.b16 %v346, %v345
    %v377 = vpack.c.b16 %v348, %v347
    %v378 = vpack.c.b16 %v350, %v349
    %v379 = vpack.c.b16 %v352, %v351
    %v380 = vpack.c.b16 %v354, %v353
    %v381 = vpack.c.b16 %v356, %v355
    %v382 = vpack.c.b16 %v358, %v357
    %v383 = vpack.c.b16 %v360, %v359
    %v384 = vpack.c.b16 %v362, %v361
    %v385 = vpack.c.b16 %v364, %v363
    %v386 = vpack.c.b16 %v366, %v365
    %v387 = vpack.c.b16 %v368, %v367
    %v388 = vpack.c.b16 %v370, %v369
    %v389 = vpack.c.b16 %v372, %v371
    %v390 = vpack.c.b16 %v374, %v373
    %407 = vmatpush.bf16.msra.mxu0 %v382
    %408 = vmatpush.bf16.msra.mxu0 %v381
    %409 = vmatpush.bf16.msra.mxu0 %v380
    %410 = vmatpush.bf16.msra.mxu0 %v379
    %411 = vmatpush.bf16.msra.mxu0 %v378
    %412 = vmatpush.bf16.msra.mxu0 %v377
    %413 = vmatpush.bf16.msra.mxu0 %v376
    %414 = vmatpush.bf16.msra.mxu0 %v375
    %415 = vmatmul.bf16.gmra.mxu0 %v247
    %v416 = vpop.f32.mrf.mxu0
    %v417 = vadd.f32 0.0, %v416
    %v418 = vpop.f32.mrf.mxu0
    %v419 = vadd.f32 0.0, %v418
    %420 = vmatmul.bf16.gmra.mxu0 %v249
    %v421 = vpop.f32.mrf.mxu0
    %v422 = vadd.f32 0.0, %v421
    %v423 = vpop.f32.mrf.mxu0
    %v424 = vadd.f32 0.0, %v423
    %425 = vmatmul.bf16.gmra.mxu0 %v251
    %v426 = vpop.f32.mrf.mxu0
    %v427 = vadd.f32 0.0, %v426
    %v428 = vpop.f32.mrf.mxu0
    %v429 = vadd.f32 0.0, %v428
    %430 = vmatmul.bf16.gmra.mxu0 %v253
    %v431 = vpop.f32.mrf.mxu0
    %v432 = vadd.f32 0.0, %v431
    %v433 = vpop.f32.mrf.mxu0
    %v434 = vadd.f32 0.0, %v433
    %435 = vmatmul.bf16.gmra.mxu0 %v255
    %v436 = vpop.f32.mrf.mxu0
    %v437 = vadd.f32 0.0, %v436
    %v438 = vpop.f32.mrf.mxu0
    %v439 = vadd.f32 0.0, %v438
    %440 = vmatmul.bf16.gmra.mxu0 %v257
    %v441 = vpop.f32.mrf.mxu0
    %v442 = vadd.f32 0.0, %v441
    %v443 = vpop.f32.mrf.mxu0
    %v444 = vadd.f32 0.0, %v443
    %445 = vmatmul.bf16.gmra.mxu0 %v259
    %v446 = vpop.f32.mrf.mxu0
    %v447 = vadd.f32 0.0, %v446
    %v448 = vpop.f32.mrf.mxu0
    %v449 = vadd.f32 0.0, %v448
    %450 = vmatmul.bf16.gmra.mxu0 %v261
    %v451 = vpop.f32.mrf.mxu0
    %v452 = vadd.f32 0.0, %v451
    %v453 = vpop.f32.mrf.mxu0
    %v454 = vadd.f32 0.0, %v453
    %455 = vmatmul.bf16.gmra.mxu0 %v263
    %v456 = vpop.f32.mrf.mxu0
    %v457 = vadd.f32 0.0, %v456
    %v458 = vpop.f32.mrf.mxu0
    %v459 = vadd.f32 0.0, %v458
    %460 = vmatmul.bf16.gmra.mxu0 %v265
    %v461 = vpop.f32.mrf.mxu0
    %v462 = vadd.f32 0.0, %v461
    %v463 = vpop.f32.mrf.mxu0
    %v464 = vadd.f32 0.0, %v463
    %465 = vmatmul.bf16.gmra.mxu0 %v267
    %v466 = vpop.f32.mrf.mxu0
    %v467 = vadd.f32 0.0, %v466
    %v468 = vpop.f32.mrf.mxu0
    %v469 = vadd.f32 0.0, %v468
    %470 = vmatmul.bf16.gmra.mxu0 %v269
    %v471 = vpop.f32.mrf.mxu0
    %v472 = vadd.f32 0.0, %v471
    %v473 = vpop.f32.mrf.mxu0
    %v474 = vadd.f32 0.0, %v473
    %475 = vmatmul.bf16.gmra.mxu0 %v271
    %v476 = vpop.f32.mrf.mxu0
    %v477 = vadd.f32 0.0, %v476
    %v478 = vpop.f32.mrf.mxu0
    %v479 = vadd.f32 0.0, %v478
    %480 = vmatmul.bf16.gmra.mxu0 %v273
    %v481 = vpop.f32.mrf.mxu0
    %v482 = vadd.f32 0.0, %v481
    %v483 = vpop.f32.mrf.mxu0
    %v484 = vadd.f32 0.0, %v483
    %485 = vmatmul.bf16.gmra.mxu0 %v275
    %v486 = vpop.f32.mrf.mxu0
    %v487 = vadd.f32 0.0, %v486
    %v488 = vpop.f32.mrf.mxu0
    %v489 = vadd.f32 0.0, %v488
    %490 = vmatmul.bf16.gmra.mxu0 %v277
    %v491 = vpop.f32.mrf.mxu0
    %v492 = vadd.f32 0.0, %v491
    %v493 = vpop.f32.mrf.mxu0
    %v494 = vadd.f32 0.0, %v493
    %495 = vdwg.mxu0
    %496 = vmatpush.bf16.msra.mxu0 %v390
    %497 = vmatpush.bf16.msra.mxu0 %v389
    %498 = vmatpush.bf16.msra.mxu0 %v388
    %499 = vmatpush.bf16.msra.mxu0 %v387
    %500 = vmatpush.bf16.msra.mxu0 %v386
    %501 = vmatpush.bf16.msra.mxu0 %v385
    %502 = vmatpush.bf16.msra.mxu0 %v384
    %503 = vmatpush.bf16.msra.mxu0 %v383
    %504 = vmatmul.bf16.gmra.mxu0 %v248
    %v505 = vpop.f32.mrf.mxu0
    %v506 = vadd.f32 %v417, %v505
    %v507 = vpop.f32.mrf.mxu0
    %v508 = vadd.f32 %v419, %v507
    %509 = vmatmul.bf16.gmra.mxu0 %v250
    %v510 = vpop.f32.mrf.mxu0
    %v511 = vadd.f32 %v422, %v510
    %v512 = vpop.f32.mrf.mxu0
    %v513 = vadd.f32 %v424, %v512
    %514 = vmatmul.bf16.gmra.mxu0 %v252
    %v515 = vpop.f32.mrf.mxu0
    %v516 = vadd.f32 %v427, %v515
    %v517 = vpop.f32.mrf.mxu0
    %v518 = vadd.f32 %v429, %v517
    %519 = vmatmul.bf16.gmra.mxu0 %v254
    %v520 = vpop.f32.mrf.mxu0
    %v521 = vadd.f32 %v432, %v520
    %v522 = vpop.f32.mrf.mxu0
    %v523 = vadd.f32 %v434, %v522
    %524 = vmatmul.bf16.gmra.mxu0 %v256
    %v525 = vpop.f32.mrf.mxu0
    %v526 = vadd.f32 %v437, %v525
    %v527 = vpop.f32.mrf.mxu0
    %v528 = vadd.f32 %v439, %v527
    %529 = vmatmul.bf16.gmra.mxu0 %v258
    %v530 = vpop.f32.mrf.mxu0
    %v531 = vadd.f32 %v442, %v530
    %v532 = vpop.f32.mrf.mxu0
    %v533 = vadd.f32 %v444, %v532
    %534 = vmatmul.bf16.gmra.mxu0 %v260
    %v535 = vpop.f32.mrf.mxu0
    %v536 = vadd.f32 %v447, %v535
    %v537 = vpop.f32.mrf.mxu0
    %v538 = vadd.f32 %v449, %v537
    %539 = vmatmul.bf16.gmra.mxu0 %v262
    %v540 = vpop.f32.mrf.mxu0
    %v541 = vadd.f32 %v452, %v540
    %v542 = vpop.f32.mrf.mxu0
    %v543 = vadd.f32 %v454, %v542
    %544 = vmatmul.bf16.gmra.mxu0 %v264
    %v545 = vpop.f32.mrf.mxu0
    %v546 = vadd.f32 %v457, %v545
    %v547 = vpop.f32.mrf.mxu0
    %v548 = vadd.f32 %v459, %v547
    %549 = vmatmul.bf16.gmra.mxu0 %v266
    %v550 = vpop.f32.mrf.mxu0
    %v551 = vadd.f32 %v462, %v550
    %v552 = vpop.f32.mrf.mxu0
    %v553 = vadd.f32 %v464, %v552
    %554 = vmatmul.bf16.gmra.mxu0 %v268
    %v555 = vpop.f32.mrf.mxu0
    %v556 = vadd.f32 %v467, %v555
    %v557 = vpop.f32.mrf.mxu0
    %v558 = vadd.f32 %v469, %v557
    %559 = vmatmul.bf16.gmra.mxu0 %v270
    %v560 = vpop.f32.mrf.mxu0
    %v561 = vadd.f32 %v472, %v560
    %v562 = vpop.f32.mrf.mxu0
    %v563 = vadd.f32 %v474, %v562
    %564 = vmatmul.bf16.gmra.mxu0 %v272
    %v565 = vpop.f32.mrf.mxu0
    %v566 = vadd.f32 %v477, %v565
    %v567 = vpop.f32.mrf.mxu0
    %v568 = vadd.f32 %v479, %v567
    %569 = vmatmul.bf16.gmra.mxu0 %v274
    %v570 = vpop.f32.mrf.mxu0
    %v571 = vadd.f32 %v482, %v570
    %v572 = vpop.f32.mrf.mxu0
    %v573 = vadd.f32 %v484, %v572
    %574 = vmatmul.bf16.gmra.mxu0 %v276
    %v575 = vpop.f32.mrf.mxu0
    %v576 = vadd.f32 %v487, %v575
    %v577 = vpop.f32.mrf.mxu0
    %v578 = vadd.f32 %v489, %v577
    %579 = vmatmul.bf16.gmra.mxu0 %v278
    %v580 = vpop.f32.mrf.mxu0
    %v581 = vadd.f32 %v492, %v580
    %v582 = vpop.f32.mrf.mxu0
    %v583 = vadd.f32 %v494, %v582
    %584 = vdwg.mxu0
    %v585 = vpack.c.bf16 %v508, %v506
    %v586 = vpack.c.bf16 %v513, %v511
    %v587 = vpack.c.bf16 %v518, %v516
    %v588 = vpack.c.bf16 %v523, %v521
    %v589 = vpack.c.bf16 %v528, %v526
    %v590 = vpack.c.bf16 %v533, %v531
    %v591 = vpack.c.bf16 %v538, %v536
    %v592 = vpack.c.bf16 %v543, %v541
    %v593 = vpack.c.bf16 %v548, %v546
    %v594 = vpack.c.bf16 %v553, %v551
    %v595 = vpack.c.bf16 %v558, %v556
    %v596 = vpack.c.bf16 %v563, %v561
    %v597 = vpack.c.bf16 %v568, %v566
    %v598 = vpack.c.bf16 %v573, %v571
    %v599 = vpack.c.bf16 %v578, %v576
    %v600 = vpack.c.bf16 %v583, %v581
    %v601 = vld [vmem:[#allocation7] sm:$0xf]
    %v602 = vld [vmem:[#allocation7 + $0x4] sm:$0xf]
    %v603 = vld [vmem:[#allocation7 + $0x8] sm:$0xf]
    %v604 = vld [vmem:[#allocation7 + $0xc] sm:$0xf]
    %v605 = vld [vmem:[#allocation7 + $0x10] sm:$0xf]
    %v606 = vld [vmem:[#allocation7 + $0x14] sm:$0xf]
    %v607 = vld [vmem:[#allocation7 + $0x18] sm:$0xf]
    %v608 = vld [vmem:[#allocation7 + $0x1c] sm:$0xf]
    %v609 = vld [vmem:[#allocation7 + $0x20] sm:$0xf]
    %v610 = vld [vmem:[#allocation7 + $0x24] sm:$0xf]
    %v611 = vld [vmem:[#allocation7 + $0x28] sm:$0xf]
    %v612 = vld [vmem:[#allocation7 + $0x2c] sm:$0xf]
    %v613 = vld [vmem:[#allocation7 + $0x30] sm:$0xf]
    %v614 = vld [vmem:[#allocation7 + $0x34] sm:$0xf]
    %v615 = vld [vmem:[#allocation7 + $0x38] sm:$0xf]
    %v616 = vld [vmem:[#allocation7 + $0x3c] sm:$0xf]
    %v617 = vld [vmem:[%s3] sm:$0x1]
    %v619 = vperm.slane %v617, 0
    %v637 = vunpack.c.l.b16 %v601
    %v638 = vunpack.c.l.b16 %v602
    %v639 = vunpack.c.l.b16 %v603
    %v640 = vunpack.c.l.b16 %v604
    %v641 = vunpack.c.l.b16 %v605
    %v642 = vunpack.c.l.b16 %v606
    %v643 = vunpack.c.l.b16 %v607
    %v644 = vunpack.c.l.b16 %v608
    %v645 = vunpack.c.l.b16 %v609
    %v646 = vunpack.c.l.b16 %v610
    %v647 = vunpack.c.l.b16 %v611
    %v648 = vunpack.c.l.b16 %v612
    %v649 = vunpack.c.l.b16 %v613
    %v650 = vunpack.c.l.b16 %v614
    %v651 = vunpack.c.l.b16 %v615
    %v652 = vunpack.c.l.b16 %v616
    %v653 = vpack.c.b16 %v638, %v637
    %v654 = vpack.c.b16 %v640, %v639
    %v655 = vpack.c.b16 %v642, %v641
    %v656 = vpack.c.b16 %v644, %v643
    %v657 = vpack.c.b16 %v646, %v645
    %v658 = vpack.c.b16 %v648, %v647
    %v659 = vpack.c.b16 %v650, %v649
    %v660 = vpack.c.b16 %v652, %v651
    %669 = vmatpush.bf16.msra.mxu0 %v660
    %670 = vmatpush.bf16.msra.mxu0 %v659
    %671 = vmatpush.bf16.msra.mxu0 %v658
    %672 = vmatpush.bf16.msra.mxu0 %v657
    %673 = vmatpush.bf16.msra.mxu0 %v656
    %674 = vmatpush.bf16.msra.mxu0 %v655
    %675 = vmatpush.bf16.msra.mxu0 %v654
    %676 = vmatpush.bf16.msra.mxu0 %v653
    %677 = vmatmul.bf16.gmra.mxu0 %v585
    %v678 = vpop.f32.mrf.mxu0
    %v679 = vadd.f32 %v619, %v678
    %v680 = vpop.f32.mrf.mxu0
    %v681 = vadd.f32 %v619, %v680
    %682 = vmatmul.bf16.gmra.mxu0 %v586
    %v683 = vpop.f32.mrf.mxu0
    %v684 = vadd.f32 %v619, %v683
    %v685 = vpop.f32.mrf.mxu0
    %v686 = vadd.f32 %v619, %v685
    %687 = vmatmul.bf16.gmra.mxu0 %v587
    %v688 = vpop.f32.mrf.mxu0
    %v689 = vadd.f32 %v619, %v688
    %v690 = vpop.f32.mrf.mxu0
    %v691 = vadd.f32 %v619, %v690
    %692 = vmatmul.bf16.gmra.mxu0 %v588
    %v693 = vpop.f32.mrf.mxu0
    %v694 = vadd.f32 %v619, %v693
    %v695 = vpop.f32.mrf.mxu0
    %v696 = vadd.f32 %v619, %v695
    %697 = vmatmul.bf16.gmra.mxu0 %v589
    %v698 = vpop.f32.mrf.mxu0
    %v699 = vadd.f32 %v619, %v698
    %v700 = vpop.f32.mrf.mxu0
    %v701 = vadd.f32 %v619, %v700
    %702 = vmatmul.bf16.gmra.mxu0 %v590
    %v703 = vpop.f32.mrf.mxu0
    %v704 = vadd.f32 %v619, %v703
    %v705 = vpop.f32.mrf.mxu0
    %v706 = vadd.f32 %v619, %v705
    %707 = vmatmul.bf16.gmra.mxu0 %v591
    %v708 = vpop.f32.mrf.mxu0
    %v709 = vadd.f32 %v619, %v708
    %v710 = vpop.f32.mrf.mxu0
    %v711 = vadd.f32 %v619, %v710
    %712 = vmatmul.bf16.gmra.mxu0 %v592
    %v713 = vpop.f32.mrf.mxu0
    %v714 = vadd.f32 %v619, %v713
    %v715 = vpop.f32.mrf.mxu0
    %v716 = vadd.f32 %v619, %v715
    %717 = vmatmul.bf16.gmra.mxu0 %v593
    %v718 = vpop.f32.mrf.mxu0
    %v719 = vadd.f32 %v619, %v718
    %v720 = vpop.f32.mrf.mxu0
    %v721 = vadd.f32 %v619, %v720
    %722 = vmatmul.bf16.gmra.mxu0 %v594
    %v723 = vpop.f32.mrf.mxu0
    %v724 = vadd.f32 %v619, %v723
    %v725 = vpop.f32.mrf.mxu0
    %v726 = vadd.f32 %v619, %v725
    %727 = vmatmul.bf16.gmra.mxu0 %v595
    %v728 = vpop.f32.mrf.mxu0
    %v729 = vadd.f32 %v619, %v728
    %v730 = vpop.f32.mrf.mxu0
    %v731 = vadd.f32 %v619, %v730
    %732 = vmatmul.bf16.gmra.mxu0 %v596
    %v733 = vpop.f32.mrf.mxu0
    %v734 = vadd.f32 %v619, %v733
    %v735 = vpop.f32.mrf.mxu0
    %v736 = vadd.f32 %v619, %v735
    %737 = vmatmul.bf16.gmra.mxu0 %v597
    %v738 = vpop.f32.mrf.mxu0
    %v739 = vadd.f32 %v619, %v738
    %v740 = vpop.f32.mrf.mxu0
    %v741 = vadd.f32 %v619, %v740
    %742 = vmatmul.bf16.gmra.mxu0 %v598
    %v743 = vpop.f32.mrf.mxu0
    %v744 = vadd.f32 %v619, %v743
    %v745 = vpop.f32.mrf.mxu0
    %v746 = vadd.f32 %v619, %v745
    %747 = vmatmul.bf16.gmra.mxu0 %v599
    %v748 = vpop.f32.mrf.mxu0
    %v749 = vadd.f32 %v619, %v748
    %v750 = vpop.f32.mrf.mxu0
    %v751 = vadd.f32 %v619, %v750
    %752 = vmatmul.bf16.gmra.mxu0 %v600
    %v753 = vpop.f32.mrf.mxu0
    %v754 = vadd.f32 %v619, %v753
    %v755 = vpop.f32.mrf.mxu0
    %v756 = vadd.f32 %v619, %v755
    %757 = vdwg.mxu0
    %v758 = vmax.f32 %v679, 0.0
    %v759 = vmax.f32 %v681, 0.0
    %v760 = vmax.f32 %v684, 0.0
    %v761 = vmax.f32 %v686, 0.0
    %v762 = vmax.f32 %v689, 0.0
    %v763 = vmax.f32 %v691, 0.0
    %v764 = vmax.f32 %v694, 0.0
    %v765 = vmax.f32 %v696, 0.0
    %v766 = vmax.f32 %v699, 0.0
    %v767 = vmax.f32 %v701, 0.0
    %v768 = vmax.f32 %v704, 0.0
    %v769 = vmax.f32 %v706, 0.0
    %v770 = vmax.f32 %v709, 0.0
    %v771 = vmax.f32 %v711, 0.0
    %v772 = vmax.f32 %v714, 0.0
    %v773 = vmax.f32 %v716, 0.0
    %v774 = vmax.f32 %v719, 0.0
    %v775 = vmax.f32 %v721, 0.0
    %v776 = vmax.f32 %v724, 0.0
    %v777 = vmax.f32 %v726, 0.0
    %v778 = vmax.f32 %v729, 0.0
    %v779 = vmax.f32 %v731, 0.0
    %v780 = vmax.f32 %v734, 0.0
    %v781 = vmax.f32 %v736, 0.0
    %v782 = vmax.f32 %v739, 0.0
    %v783 = vmax.f32 %v741, 0.0
    %v784 = vmax.f32 %v744, 0.0
    %v785 = vmax.f32 %v746, 0.0
    %v786 = vmax.f32 %v749, 0.0
    %v787 = vmax.f32 %v751, 0.0
    %v788 = vmax.f32 %v754, 0.0
    %v789 = vmax.f32 %v756, 0.0
    %v790 = vpack.c.bf16 %v759, %v758
    %v791 = vpack.c.bf16 %v761, %v760
    %v792 = vpack.c.bf16 %v763, %v762
    %v793 = vpack.c.bf16 %v765, %v764
    %v794 = vpack.c.bf16 %v767, %v766
    %v795 = vpack.c.bf16 %v769, %v768
    %v796 = vpack.c.bf16 %v771, %v770
    %v797 = vpack.c.bf16 %v773, %v772
    %v798 = vpack.c.bf16 %v775, %v774
    %v799 = vpack.c.bf16 %v777, %v776
    %v800 = vpack.c.bf16 %v779, %v778
    %v801 = vpack.c.bf16 %v781, %v780
    %v802 = vpack.c.bf16 %v783, %v782
    %v803 = vpack.c.bf16 %v785, %v784
    %v804 = vpack.c.bf16 %v787, %v786
    %v805 = vpack.c.bf16 %v789, %v788
    %v806 = vld [vmem:[#allocation8] sm:$0xf]
    %v807 = vld [vmem:[#allocation8 + $0x4] sm:$0xf]
    %v808 = vld [vmem:[#allocation8 + $0x8] sm:$0xf]
    %v809 = vld [vmem:[#allocation8 + $0xc] sm:$0xf]
    %v810 = vld [vmem:[#allocation8 + $0x10] sm:$0xf]
    %v811 = vld [vmem:[#allocation8 + $0x14] sm:$0xf]
    %v812 = vld [vmem:[#allocation8 + $0x18] sm:$0xf]
    %v813 = vld [vmem:[#allocation8 + $0x1c] sm:$0xf]
    %v814 = vld [vmem:[#allocation8 + $0x20] sm:$0xf]
    %v815 = vld [vmem:[#allocation8 + $0x24] sm:$0xf]
    %v816 = vld [vmem:[#allocation8 + $0x28] sm:$0xf]
    %v817 = vld [vmem:[#allocation8 + $0x2c] sm:$0xf]
    %v818 = vld [vmem:[#allocation8 + $0x30] sm:$0xf]
    %v819 = vld [vmem:[#allocation8 + $0x34] sm:$0xf]
    %v820 = vld [vmem:[#allocation8 + $0x38] sm:$0xf]
    %v821 = vld [vmem:[#allocation8 + $0x3c] sm:$0xf]
    %v838 = vunpack.c.l.b16 %v806
    %v839 = vunpack.c.l.b16 %v807
    %v840 = vunpack.c.l.b16 %v808
    %v841 = vunpack.c.l.b16 %v809
    %v842 = vunpack.c.l.b16 %v810
    %v843 = vunpack.c.l.b16 %v811
    %v844 = vunpack.c.l.b16 %v812
    %v845 = vunpack.c.l.b16 %v813
    %v846 = vunpack.c.l.b16 %v814
    %v847 = vunpack.c.l.b16 %v815
    %v848 = vunpack.c.l.b16 %v816
    %v849 = vunpack.c.l.b16 %v817
    %v850 = vunpack.c.l.b16 %v818
    %v851 = vunpack.c.l.b16 %v819
    %v852 = vunpack.c.l.b16 %v820
    %v853 = vunpack.c.l.b16 %v821
    %v854 = vpack.c.b16 %v839, %v838
    %v855 = vpack.c.b16 %v841, %v840
    %v856 = vpack.c.b16 %v843, %v842
    %v857 = vpack.c.b16 %v845, %v844
    %v858 = vpack.c.b16 %v847, %v846
    %v859 = vpack.c.b16 %v849, %v848
    %v860 = vpack.c.b16 %v851, %v850
    %v861 = vpack.c.b16 %v853, %v852
    %870 = vmatpush.bf16.msra.mxu0 %v861
    %871 = vmatpush.bf16.msra.mxu0 %v860
    %872 = vmatpush.bf16.msra.mxu0 %v859
    %873 = vmatpush.bf16.msra.mxu0 %v858
    %874 = vmatpush.bf16.msra.mxu0 %v857
    %875 = vmatpush.bf16.msra.mxu0 %v856
    %876 = vmatpush.bf16.msra.mxu0 %v855
    %877 = vmatpush.bf16.msra.mxu0 %v854
    %878 = vmatmul.bf16.gmra.mxu0 %v790
    %v879 = vpop.f32.mrf.mxu0
    %v880 = vadd.f32 0.0, %v879
    %v881 = vpop.f32.mrf.mxu0
    %v882 = vadd.f32 0.0, %v881
    %883 = vmatmul.bf16.gmra.mxu0 %v791
    %v884 = vpop.f32.mrf.mxu0
    %v885 = vadd.f32 0.0, %v884
    %v886 = vpop.f32.mrf.mxu0
    %v887 = vadd.f32 0.0, %v886
    %888 = vmatmul.bf16.gmra.mxu0 %v792
    %v889 = vpop.f32.mrf.mxu0
    %v890 = vadd.f32 0.0, %v889
    %v891 = vpop.f32.mrf.mxu0
    %v892 = vadd.f32 0.0, %v891
    %893 = vmatmul.bf16.gmra.mxu0 %v793
    %v894 = vpop.f32.mrf.mxu0
    %v895 = vadd.f32 0.0, %v894
    %v896 = vpop.f32.mrf.mxu0
    %v897 = vadd.f32 0.0, %v896
    %898 = vmatmul.bf16.gmra.mxu0 %v794
    %v899 = vpop.f32.mrf.mxu0
    %v900 = vadd.f32 0.0, %v899
    %v901 = vpop.f32.mrf.mxu0
    %v902 = vadd.f32 0.0, %v901
    %903 = vmatmul.bf16.gmra.mxu0 %v795
    %v904 = vpop.f32.mrf.mxu0
    %v905 = vadd.f32 0.0, %v904
    %v906 = vpop.f32.mrf.mxu0
    %v907 = vadd.f32 0.0, %v906
    %908 = vmatmul.bf16.gmra.mxu0 %v796
    %v909 = vpop.f32.mrf.mxu0
    %v910 = vadd.f32 0.0, %v909
    %v911 = vpop.f32.mrf.mxu0
    %v912 = vadd.f32 0.0, %v911
    %913 = vmatmul.bf16.gmra.mxu0 %v797
    %v914 = vpop.f32.mrf.mxu0
    %v915 = vadd.f32 0.0, %v914
    %v916 = vpop.f32.mrf.mxu0
    %v917 = vadd.f32 0.0, %v916
    %918 = vmatmul.bf16.gmra.mxu0 %v798
    %v919 = vpop.f32.mrf.mxu0
    %v920 = vadd.f32 0.0, %v919
    %v921 = vpop.f32.mrf.mxu0
    %v922 = vadd.f32 0.0, %v921
    %923 = vmatmul.bf16.gmra.mxu0 %v799
    %v924 = vpop.f32.mrf.mxu0
    %v925 = vadd.f32 0.0, %v924
    %v926 = vpop.f32.mrf.mxu0
    %v927 = vadd.f32 0.0, %v926
    %928 = vmatmul.bf16.gmra.mxu0 %v800
    %v929 = vpop.f32.mrf.mxu0
    %v930 = vadd.f32 0.0, %v929
    %v931 = vpop.f32.mrf.mxu0
    %v932 = vadd.f32 0.0, %v931
    %933 = vmatmul.bf16.gmra.mxu0 %v801
    %v934 = vpop.f32.mrf.mxu0
    %v935 = vadd.f32 0.0, %v934
    %v936 = vpop.f32.mrf.mxu0
    %v937 = vadd.f32 0.0, %v936
    %938 = vmatmul.bf16.gmra.mxu0 %v802
    %v939 = vpop.f32.mrf.mxu0
    %v940 = vadd.f32 0.0, %v939
    %v941 = vpop.f32.mrf.mxu0
    %v942 = vadd.f32 0.0, %v941
    %943 = vmatmul.bf16.gmra.mxu0 %v803
    %v944 = vpop.f32.mrf.mxu0
    %v945 = vadd.f32 0.0, %v944
    %v946 = vpop.f32.mrf.mxu0
    %v947 = vadd.f32 0.0, %v946
    %948 = vmatmul.bf16.gmra.mxu0 %v804
    %v949 = vpop.f32.mrf.mxu0
    %v950 = vadd.f32 0.0, %v949
    %v951 = vpop.f32.mrf.mxu0
    %v952 = vadd.f32 0.0, %v951
    %953 = vmatmul.bf16.gmra.mxu0 %v805
    %v954 = vpop.f32.mrf.mxu0
    %v955 = vadd.f32 0.0, %v954
    %v956 = vpop.f32.mrf.mxu0
    %v957 = vadd.f32 0.0, %v956
    %958 = vdwg.mxu0
    %v959 = vpack.c.bf16 %v882, %v880
    %v960 = vpack.c.bf16 %v887, %v885
    %v961 = vpack.c.bf16 %v892, %v890
    %v962 = vpack.c.bf16 %v897, %v895
    %v963 = vpack.c.bf16 %v902, %v900
    %v964 = vpack.c.bf16 %v907, %v905
    %v965 = vpack.c.bf16 %v912, %v910
    %v966 = vpack.c.bf16 %v917, %v915
    %v967 = vpack.c.bf16 %v922, %v920
    %v968 = vpack.c.bf16 %v927, %v925
    %v969 = vpack.c.bf16 %v932, %v930
    %v970 = vpack.c.bf16 %v937, %v935
    %v971 = vpack.c.bf16 %v942, %v940
    %v972 = vpack.c.bf16 %v947, %v945
    %v973 = vpack.c.bf16 %v952, %v950
    %v974 = vpack.c.bf16 %v957, %v955
    %v975 = vld [vmem:[%s5] sm:$0x1]
    %v977 = vperm.slane %v975, 0
    %979 = vmatpush.bf16.msra.mxu0 %v966
    %980 = vmatpush.bf16.msra.mxu0 %v965
    %981 = vmatpush.bf16.msra.mxu0 %v964
    %982 = vmatpush.bf16.msra.mxu0 %v963
    %983 = vmatpush.bf16.msra.mxu0 %v962
    %984 = vmatpush.bf16.msra.mxu0 %v961
    %985 = vmatpush.bf16.msra.mxu0 %v960
    %986 = vmatpush.bf16.msra.mxu0 %v959
    %987 = vmatmul.bf16.gmra.mxu0 %v247
    %v988 = vpop.f32.mrf.mxu0
    %v989 = vadd.f32 %v977, %v988
    %v990 = vpop.f32.mrf.mxu0
    %v991 = vadd.f32 %v977, %v990
    %992 = vmatmul.bf16.gmra.mxu0 %v249
    %v993 = vpop.f32.mrf.mxu0
    %v994 = vadd.f32 %v977, %v993
    %v995 = vpop.f32.mrf.mxu0
    %v996 = vadd.f32 %v977, %v995
    %997 = vmatmul.bf16.gmra.mxu0 %v251
    %v998 = vpop.f32.mrf.mxu0
    %v999 = vadd.f32 %v977, %v998
    %v1000 = vpop.f32.mrf.mxu0
    %v1001 = vadd.f32 %v977, %v1000
    %1002 = vmatmul.bf16.gmra.mxu0 %v253
    %v1003 = vpop.f32.mrf.mxu0
    %v1004 = vadd.f32 %v977, %v1003
    %v1005 = vpop.f32.mrf.mxu0
    %v1006 = vadd.f32 %v977, %v1005
    %1007 = vmatmul.bf16.gmra.mxu0 %v255
    %v1008 = vpop.f32.mrf.mxu0
    %v1009 = vadd.f32 %v977, %v1008
    %v1010 = vpop.f32.mrf.mxu0
    %v1011 = vadd.f32 %v977, %v1010
    %1012 = vmatmul.bf16.gmra.mxu0 %v257
    %v1013 = vpop.f32.mrf.mxu0
    %v1014 = vadd.f32 %v977, %v1013
    %v1015 = vpop.f32.mrf.mxu0
    %v1016 = vadd.f32 %v977, %v1015
    %1017 = vmatmul.bf16.gmra.mxu0 %v259
    %v1018 = vpop.f32.mrf.mxu0
    %v1019 = vadd.f32 %v977, %v1018
    %v1020 = vpop.f32.mrf.mxu0
    %v1021 = vadd.f32 %v977, %v1020
    %1022 = vmatmul.bf16.gmra.mxu0 %v261
    %v1023 = vpop.f32.mrf.mxu0
    %v1024 = vadd.f32 %v977, %v1023
    %v1025 = vpop.f32.mrf.mxu0
    %v1026 = vadd.f32 %v977, %v1025
    %1027 = vmatmul.bf16.gmra.mxu0 %v263
    %v1028 = vpop.f32.mrf.mxu0
    %v1029 = vadd.f32 %v977, %v1028
    %v1030 = vpop.f32.mrf.mxu0
    %v1031 = vadd.f32 %v977, %v1030
    %1032 = vmatmul.bf16.gmra.mxu0 %v265
    %v1033 = vpop.f32.mrf.mxu0
    %v1034 = vadd.f32 %v977, %v1033
    %v1035 = vpop.f32.mrf.mxu0
    %v1036 = vadd.f32 %v977, %v1035
    %1037 = vmatmul.bf16.gmra.mxu0 %v267
    %v1038 = vpop.f32.mrf.mxu0
    %v1039 = vadd.f32 %v977, %v1038
    %v1040 = vpop.f32.mrf.mxu0
    %v1041 = vadd.f32 %v977, %v1040
    %1042 = vmatmul.bf16.gmra.mxu0 %v269
    %v1043 = vpop.f32.mrf.mxu0
    %v1044 = vadd.f32 %v977, %v1043
    %v1045 = vpop.f32.mrf.mxu0
    %v1046 = vadd.f32 %v977, %v1045
    %1047 = vmatmul.bf16.gmra.mxu0 %v271
    %v1048 = vpop.f32.mrf.mxu0
    %v1049 = vadd.f32 %v977, %v1048
    %v1050 = vpop.f32.mrf.mxu0
    %v1051 = vadd.f32 %v977, %v1050
    %1052 = vmatmul.bf16.gmra.mxu0 %v273
    %v1053 = vpop.f32.mrf.mxu0
    %v1054 = vadd.f32 %v977, %v1053
    %v1055 = vpop.f32.mrf.mxu0
    %v1056 = vadd.f32 %v977, %v1055
    %1057 = vmatmul.bf16.gmra.mxu0 %v275
    %v1058 = vpop.f32.mrf.mxu0
    %v1059 = vadd.f32 %v977, %v1058
    %v1060 = vpop.f32.mrf.mxu0
    %v1061 = vadd.f32 %v977, %v1060
    %1062 = vmatmul.bf16.gmra.mxu0 %v277
    %v1063 = vpop.f32.mrf.mxu0
    %v1064 = vadd.f32 %v977, %v1063
    %v1065 = vpop.f32.mrf.mxu0
    %v1066 = vadd.f32 %v977, %v1065
    %1067 = vdwg.mxu0
    %1068 = vmatpush.bf16.msra.mxu0 %v974
    %1069 = vmatpush.bf16.msra.mxu0 %v973
    %1070 = vmatpush.bf16.msra.mxu0 %v972
    %1071 = vmatpush.bf16.msra.mxu0 %v971
    %1072 = vmatpush.bf16.msra.mxu0 %v970
    %1073 = vmatpush.bf16.msra.mxu0 %v969
    %1074 = vmatpush.bf16.msra.mxu0 %v968
    %1075 = vmatpush.bf16.msra.mxu0 %v967
    %1076 = vmatmul.bf16.gmra.mxu0 %v248
    %v1077 = vpop.f32.mrf.mxu0
    %v1078 = vadd.f32 %v989, %v1077
    %v1079 = vpop.f32.mrf.mxu0
    %v1080 = vadd.f32 %v991, %v1079
    %1081 = vmatmul.bf16.gmra.mxu0 %v250
    %v1082 = vpop.f32.mrf.mxu0
    %v1083 = vadd.f32 %v994, %v1082
    %v1084 = vpop.f32.mrf.mxu0
    %v1085 = vadd.f32 %v996, %v1084
    %1086 = vmatmul.bf16.gmra.mxu0 %v252
    %v1087 = vpop.f32.mrf.mxu0
    %v1088 = vadd.f32 %v999, %v1087
    %v1089 = vpop.f32.mrf.mxu0
    %v1090 = vadd.f32 %v1001, %v1089
    %1091 = vmatmul.bf16.gmra.mxu0 %v254
    %v1092 = vpop.f32.mrf.mxu0
    %v1093 = vadd.f32 %v1004, %v1092
    %v1094 = vpop.f32.mrf.mxu0
    %v1095 = vadd.f32 %v1006, %v1094
    %1096 = vmatmul.bf16.gmra.mxu0 %v256
    %v1097 = vpop.f32.mrf.mxu0
    %v1098 = vadd.f32 %v1009, %v1097
    %v1099 = vpop.f32.mrf.mxu0
    %v1100 = vadd.f32 %v1011, %v1099
    %1101 = vmatmul.bf16.gmra.mxu0 %v258
    %v1102 = vpop.f32.mrf.mxu0
    %v1103 = vadd.f32 %v1014, %v1102
    %v1104 = vpop.f32.mrf.mxu0
    %v1105 = vadd.f32 %v1016, %v1104
    %1106 = vmatmul.bf16.gmra.mxu0 %v260
    %v1107 = vpop.f32.mrf.mxu0
    %v1108 = vadd.f32 %v1019, %v1107
    %v1109 = vpop.f32.mrf.mxu0
    %v1110 = vadd.f32 %v1021, %v1109
    %1111 = vmatmul.bf16.gmra.mxu0 %v262
    %v1112 = vpop.f32.mrf.mxu0
    %v1113 = vadd.f32 %v1024, %v1112
    %v1114 = vpop.f32.mrf.mxu0
    %v1115 = vadd.f32 %v1026, %v1114
    %1116 = vmatmul.bf16.gmra.mxu0 %v264
    %v1117 = vpop.f32.mrf.mxu0
    %v1118 = vadd.f32 %v1029, %v1117
    %v1119 = vpop.f32.mrf.mxu0
    %v1120 = vadd.f32 %v1031, %v1119
    %1121 = vmatmul.bf16.gmra.mxu0 %v266
    %v1122 = vpop.f32.mrf.mxu0
    %v1123 = vadd.f32 %v1034, %v1122
    %v1124 = vpop.f32.mrf.mxu0
    %v1125 = vadd.f32 %v1036, %v1124
    %1126 = vmatmul.bf16.gmra.mxu0 %v268
    %v1127 = vpop.f32.mrf.mxu0
    %v1128 = vadd.f32 %v1039, %v1127
    %v1129 = vpop.f32.mrf.mxu0
    %v1130 = vadd.f32 %v1041, %v1129
    %1131 = vmatmul.bf16.gmra.mxu0 %v270
    %v1132 = vpop.f32.mrf.mxu0
    %v1133 = vadd.f32 %v1044, %v1132
    %v1134 = vpop.f32.mrf.mxu0
    %v1135 = vadd.f32 %v1046, %v1134
    %1136 = vmatmul.bf16.gmra.mxu0 %v272
    %v1137 = vpop.f32.mrf.mxu0
    %v1138 = vadd.f32 %v1049, %v1137
    %v1139 = vpop.f32.mrf.mxu0
    %v1140 = vadd.f32 %v1051, %v1139
    %1141 = vmatmul.bf16.gmra.mxu0 %v274
    %v1142 = vpop.f32.mrf.mxu0
    %v1143 = vadd.f32 %v1054, %v1142
    %v1144 = vpop.f32.mrf.mxu0
    %v1145 = vadd.f32 %v1056, %v1144
    %1146 = vmatmul.bf16.gmra.mxu0 %v276
    %v1147 = vpop.f32.mrf.mxu0
    %v1148 = vadd.f32 %v1059, %v1147
    %v1149 = vpop.f32.mrf.mxu0
    %v1150 = vadd.f32 %v1061, %v1149
    %1151 = vmatmul.bf16.gmra.mxu0 %v278
    %v1152 = vpop.f32.mrf.mxu0
    %v1153 = vadd.f32 %v1064, %v1152
    %v1154 = vpop.f32.mrf.mxu0
    %v1155 = vadd.f32 %v1066, %v1154
    %1156 = vdwg.mxu0
    %1157 = vst [vmem:[#allocation10] sm:$0xff] %v1078
    %1158 = vst [vmem:[#allocation10 + $0x8] sm:$0xff] %v1080
    %1159 = vst [vmem:[#allocation10 + $0x10] sm:$0xff] %v1083
    %1160 = vst [vmem:[#allocation10 + $0x18] sm:$0xff] %v1085
    %1161 = vst [vmem:[#allocation10 + $0x20] sm:$0xff] %v1088
    %1162 = vst [vmem:[#allocation10 + $0x28] sm:$0xff] %v1090
    %1163 = vst [vmem:[#allocation10 + $0x30] sm:$0xff] %v1093
    %1164 = vst [vmem:[#allocation10 + $0x38] sm:$0xff] %v1095
    %1165 = vst [vmem:[#allocation10 + $0x40] sm:$0xff] %v1098
    %1166 = vst [vmem:[#allocation10 + $0x48] sm:$0xff] %v1100
    %1167 = vst [vmem:[#allocation10 + $0x50] sm:$0xff] %v1103
    %1168 = vst [vmem:[#allocation10 + $0x58] sm:$0xff] %v1105
    %1169 = vst [vmem:[#allocation10 + $0x60] sm:$0xff] %v1108
    %1170 = vst [vmem:[#allocation10 + $0x68] sm:$0xff] %v1110
    %1171 = vst [vmem:[#allocation10 + $0x70] sm:$0xff] %v1113
    %1172 = vst [vmem:[#allocation10 + $0x78] sm:$0xff] %v1115
    %1173 = vst [vmem:[#allocation10 + $0x80] sm:$0xff] %v1118
    %1174 = vst [vmem:[#allocation10 + $0x88] sm:$0xff] %v1120
    %1175 = vst [vmem:[#allocation10 + $0x90] sm:$0xff] %v1123
    %1176 = vst [vmem:[#allocation10 + $0x98] sm:$0xff] %v1125
    %1177 = vst [vmem:[#allocation10 + $0xa0] sm:$0xff] %v1128
    %1178 = vst [vmem:[#allocation10 + $0xa8] sm:$0xff] %v1130
    %1179 = vst [vmem:[#allocation10 + $0xb0] sm:$0xff] %v1133
    %1180 = vst [vmem:[#allocation10 + $0xb8] sm:$0xff] %v1135
    %1181 = vst [vmem:[#allocation10 + $0xc0] sm:$0xff] %v1138
    %1182 = vst [vmem:[#allocation10 + $0xc8] sm:$0xff] %v1140
    %1183 = vst [vmem:[#allocation10 + $0xd0] sm:$0xff] %v1143
    %1184 = vst [vmem:[#allocation10 + $0xd8] sm:$0xff] %v1145
    %1185 = vst [vmem:[#allocation10 + $0xe0] sm:$0xff] %v1148
    %1186 = vst [vmem:[#allocation10 + $0xe8] sm:$0xff] %v1150
    %1187 = vst [vmem:[#allocation10 + $0xf0] sm:$0xff] %v1153
    %1188 = vst [vmem:[#allocation10 + $0xf8] sm:$0xff] %v1155
    // Predicated region
    $region42: #{tpu_custom_call.1} parent=1 // pred_check
      _
    $region43: #{tpu_custom_call.1} parent=1 // pred_check_branch
      %1190 = sbr.rel (0) target = $region45
    $region44: #{tpu_custom_call.1} parent=1 // pred_region
      %1192 = vsyncadd [#allocation4], 0
      %s1193 = sshll.u32 [#allocation10], 4
      %s1194 = int_to_ptr.vmem [resolvable:$true] %s1193
      %s1195 = sshll.u32 %s6, 4
      %s1196 = int_to_ptr.hbm [resolvable:$true] %s1195
      %1201 = dma.vmem_to_hbm [thread:$0]  %s1194, 4096, %s1196, [#allocation4], 128, 128, 8
    $region45: #{tpu_custom_call.1} parent=1 // pred_fallthru
      _
    // Predicated region
    $region46: #{tpu_custom_call.1} parent=1 // pred_check
      _
    $region47: #{tpu_custom_call.1} parent=1 // pred_check_branch
      %1203 = sbr.rel (0) target = $region49
    $region48: #{tpu_custom_call.1} parent=1 // pred_region
      %1205 = dma.done [#allocation4], 4096
    $region49: #{tpu_custom_call.1} parent=1 // pred_fallthru
      _
    %1206 = vsyncpa [#allocation3], 1
    %1207 = vsyncpa [#allocation6], 1
    %1208 = vsyncpa [#allocation9], 1
    %1209 = vsyncpa [#allocation4], 1

</llo_original>
